<compile_context>
chip_gen: v6e
topology: v6e:2x2x1
jax: 0.10.0
libtpu: 0.0.40
codegen_flags: <defaults>
</compile_context>

<pallas_src>
import functools

import jax
import jax.numpy as jnp
from jax import lax
from jax.experimental import pallas as pl
from jax.experimental.pallas import tpu as pltpu

GAMMA = 2.0
EPS = 1e-6
LANE_W = 128          # lane width of the retiled spatial slab


def _round_up(x, m):
    return ((x + m - 1) // m) * m


def _default_max_row_tile():
    """Rows per grid step.  v7x (3.2 TB/s HBM) wants ~4 MiB input blocks to hide
    the per-step overhead; earlier chips are fine (and v5e VMEM-safe) at 2 MiB."""
    try:
        kind = jax.devices()[0].device_kind.lower()
    except Exception:
        kind = ""
    if "7" in kind:       # v7x: 4 MiB/input block -> 16 MiB double-buffered (< 32 MiB scoped)
        return 8192
    return 4096           # v5e/v6e: 2 MiB/input block -> 8 MiB double-buffered (< 16 MiB scoped)


def _ipow(x, g):
    """x**g.  Integer g >= 1 as repeated multiply starting from x (no 1*x seed)."""
    if float(g).is_integer() and g >= 0:
        n = int(g)
        if n == 0:
            return jnp.ones_like(x)
        r = x
        for _ in range(n - 1):
            r = r * x
        return r
    # TODO(synk): fractional gamma lowers to exp(g*log(x)) -> 4 extra EUP
    # transcendentals per element; keep integer gamma if performance matters.
    return x ** g


def _soft_focal_kernel(p_ref, t_ref, pos_ref, neg_ref, *,
                       gamma, eps, valid_elems, row_tile, needs_mask):
    """Accumulates unweighted positive/negative focal-loss partial sums.

    p_ref / t_ref     : (1, row_tile, 128)   probability / target tile
    pos_ref / neg_ref : (1, 8, 128)          per-batch partial sums, VMEM-resident
                                             across the row-tile (reduction) axis.
    """
    r = pl.program_id(1)

    @pl.when(r == 0)
    def _():
        pos_ref[...] = jnp.zeros_like(pos_ref)
        neg_ref[...] = jnp.zeros_like(neg_ref)

    p = p_ref[0].astype(jnp.float32)            # (row_tile, 128)
    t = t_ref[0].astype(jnp.float32)
    one_m_p = 1.0 - p

    positive = t * jnp.log(p + eps) * _ipow(one_m_p, gamma)
    negative = (1.0 - t) * jnp.log(one_m_p + eps) * _ipow(p, gamma)

    if needs_mask:
        # Ragged tail (rows past nrows and/or lane padding): drop anything whose
        # flat per-batch element index >= valid_elems.  Pure VPU work and only
        # emitted for shapes that actually need it.
        row_i = lax.broadcasted_iota(jnp.int32, p.shape, 0)
        lane_i = lax.broadcasted_iota(jnp.int32, p.shape, 1)
        elem = r * (row_tile * LANE_W) + row_i * LANE_W + lane_i
        keep = elem < valid_elems
        positive = jnp.where(keep, positive, 0.0)
        negative = jnp.where(keep, negative, 0.0)

    # Reduce over the vreg-repeat axis only: pure (8,128)-vreg adds, no XLU.
    pos_ref[...] += jnp.sum(positive.reshape(1, -1, 8, LANE_W), axis=1)
    neg_ref[...] += jnp.sum(negative.reshape(1, -1, 8, LANE_W), axis=1)


def soft_focal_loss(probas, targets, dynamic_class_weights=None,
                    gamma=GAMMA, eps=EPS, reduction="mean", max_row_tile=None):
    """JAX/Pallas equivalent of SoftFocalLoss.forward (ignore_index=None)."""
    B, C, H, W = probas.shape
    assert C == 1, "SoftFocalLoss expects B x 1 x H x W inputs"
    P = H * W

    def _prep(x):
        x = x.reshape(B, P)                     # contiguous -> free view
        if x.dtype not in (jnp.bfloat16, jnp.float32):
            x = x.astype(jnp.float32)
        return x

    p2 = _prep(probas)
    t2 = _prep(targets)

    if dynamic_class_weights is None:
        dcw = jnp.ones((B, 2), jnp.float32)     # torch default [[1., 1.]]
    else:
        dcw = jnp.broadcast_to(
            jnp.asarray(dynamic_class_weights, jnp.float32), (B, 2))
    w_neg = dcw[:, 0]    # (B,) negative-class weight
    w_pos = dcw[:, 1]    # (B,) positive-class weight

    # ----- tiling: lane-dense (B, nrows, 128) slab; ragged rows masked in-kernel -----
    nrows = pl.cdiv(P, LANE_W)
    lane_pad = nrows * LANE_W - P
    if lane_pad:
        # TODO(synk): only hit when H*W % 128 != 0; this pad materializes a full
        # HBM copy of both inputs.  A (1, n)-blocked 2-D layout would avoid it.
        p2 = jnp.pad(p2, ((0, 0), (0, lane_pad)))
        t2 = jnp.pad(t2, ((0, 0), (0, lane_pad)))
    p3 = p2.reshape(B, nrows, LANE_W)
    t3 = t2.reshape(B, nrows, LANE_W)

    # bf16 packs two rows per sublane -> align row tiles to 16 on the bf16 path.
    row_align = 16 if (p2.dtype == jnp.bfloat16 or t2.dtype == jnp.bfloat16) else 8
    if max_row_tile is None:
        max_row_tile = _default_max_row_tile()
    max_row_tile = _round_up(int(max_row_tile), row_align)
    row_tile = min(max_row_tile, _round_up(nrows, row_align))
    n_tiles = pl.cdiv(nrows, row_tile)
    # Mask only when the kernel footprint overshoots the valid element count.
    needs_mask = (n_tiles * row_tile * LANE_W) != P

    kernel = functools.partial(
        _soft_focal_kernel, gamma=float(gamma), eps=float(eps),
        valid_elems=int(P), row_tile=int(row_tile), needs_mask=bool(needs_mask))

    pos_part, neg_part = pl.pallas_call(
        kernel,
        out_shape=(
            jax.ShapeDtypeStruct((B, 8, LANE_W), jnp.float32),
            jax.ShapeDtypeStruct((B, 8, LANE_W), jnp.float32),
        ),
        grid_spec=pltpu.PrefetchScalarGridSpec(
            num_scalar_prefetch=0,
            grid=(B, n_tiles),
            in_specs=[
                pl.BlockSpec((1, row_tile, LANE_W), lambda b, r: (b, r, 0)),
                pl.BlockSpec((1, row_tile, LANE_W), lambda b, r: (b, r, 0)),
            ],
            out_specs=[
                pl.BlockSpec((1, 8, LANE_W), lambda b, r: (b, 0, 0)),
                pl.BlockSpec((1, 8, LANE_W), lambda b, r: (b, 0, 0)),
            ],
        ),
        compiler_params=pltpu.CompilerParams(
            dimension_semantics=("parallel", "arbitrary")),
    )(p3, t3)

    # ----- tiny JAX epilogue: cross-lane reduce, class weights, negate, mean -----
    pos_sum = jnp.sum(pos_part, axis=(1, 2))    # (B,)
    neg_sum = jnp.sum(neg_part, axis=(1, 2))    # (B,)
    total = jnp.sum(w_pos * pos_sum + w_neg * neg_sum)

    if reduction == "mean":
        return -total / float(B * P)
    elif reduction == "sum":
        return -total
    else:
        # TODO(synk): reduction='none' needs a per-element output kernel;
        # ignore_index masking is likewise not implemented (module default is None).
        raise NotImplementedError(f"Invalid reduction mode: {reduction}")


def _reference(probas, targets, dcw, gamma=GAMMA, eps=EPS, reduction="mean"):
    dcw_e = dcw[..., None, None]                      # (B, 2, 1, 1)
    pos = targets * jnp.log(probas + eps) * (1.0 - probas) ** gamma
    neg = (1.0 - targets) * jnp.log(1.0 - probas + eps) * probas ** gamma
    loss = dcw_e[:, 1:2] * pos + dcw_e[:, 0:1] * neg
    if reduction == "mean":
        return -jnp.mean(loss)
    return -jnp.sum(loss)


if __name__ == "__main__":
    B = 2
    dcw = jnp.array([[0.7, 1.3], [1.0, 0.9]], jnp.float32)   # (B, 2)

    def make_inputs(H, W, key):
        k1, k2 = jax.random.split(key)
        probas = jax.random.uniform(k1, (B, 1, H, W), jnp.float32,
                                    minval=0.01, maxval=0.99)
        targets = jax.random.uniform(k2, (B, 1, H, W), jnp.float32)
        return probas, targets

    # 1) module-spec shape (16x16 -> partial row block, masked in-kernel)
    probas, targets = make_inputs(16, 16, jax.random.PRNGKey(0))
    out = jax.block_until_ready(soft_focal_loss(probas, targets, dcw))
    ref = _reference(probas, targets, dcw)
    assert jnp.allclose(out, ref, rtol=2e-5, atol=1e-6), (out, ref)

    # 2) default weights (matches torch default [[1., 1.]])
    out_d = jax.block_until_ready(soft_focal_loss(probas, targets))
    ref_d = _reference(probas, targets, jnp.ones((B, 2), jnp.float32))
    assert jnp.allclose(out_d, ref_d, rtol=2e-5, atol=1e-6), (out_d, ref_d)

    # 3) sum reduction
    out_s = jax.block_until_ready(
        soft_focal_loss(probas, targets, dcw, reduction="sum"))
    ref_s = _reference(probas, targets, dcw, reduction="sum")
    assert jnp.allclose(out_s, ref_s, rtol=1e-4, atol=1e-3), (out_s, ref_s)

    # 4) gamma = 0 (BCE path)
    out_g0 = jax.block_until_ready(
        soft_focal_loss(probas, targets, dcw, gamma=0.0))
    ref_g0 = _reference(probas, targets, dcw, gamma=0.0)
    assert jnp.allclose(out_g0, ref_g0, rtol=2e-5, atol=1e-6), (out_g0, ref_g0)

    # 5) fully aligned shape (no mask, no pad fast path)
    pa, ta = make_inputs(32, 32, jax.random.PRNGKey(1))
    out_a = jax.block_until_ready(soft_focal_loss(pa, ta, dcw))
    ref_a = _reference(pa, ta, dcw)
    assert jnp.allclose(out_a, ref_a, rtol=2e-5, atol=1e-6), (out_a, ref_a)

    # 6) multi-tile reduction axis (force a small row tile)
    pm, tmm = make_inputs(64, 64, jax.random.PRNGKey(2))
    out_m = jax.block_until_ready(soft_focal_loss(pm, tmm, dcw, max_row_tile=8))
    ref_m = _reference(pm, tmm, dcw)
    assert jnp.allclose(out_m, ref_m, rtol=2e-5, atol=1e-6), (out_m, ref_m)

    # 7) ragged multi-tile + H*W not a multiple of 128 (lane pad + mask)
    pr, trr = make_inputs(72, 72, jax.random.PRNGKey(3))
    out_r = jax.block_until_ready(soft_focal_loss(pr, trr, dcw, max_row_tile=16))
    ref_r = _reference(pr, trr, dcw)
    assert jnp.allclose(out_r, ref_r, rtol=2e-5, atol=1e-6), (out_r, ref_r)

    print("KERNEL_OK")
</pallas_src>

<mosaic_0001>
module attributes {stable_mosaic.version = 11 : i64} {
  func.func @_soft_focal_kernel(%arg0: i32, %arg1: i32, %arg2: memref<1x8x128xf32, #tpu.memory_space<vmem>>, %arg3: memref<1x8x128xf32, #tpu.memory_space<vmem>>, %arg4: memref<1x8x128xf32, #tpu.memory_space<vmem>>, %arg5: memref<1x8x128xf32, #tpu.memory_space<vmem>>) attributes {dimension_semantics = [#tpu.dimension_semantics<parallel>, #tpu.dimension_semantics<arbitrary>], iteration_bounds = array<i64: 2, 1>, scalar_prefetch = 0 : i64, scratch_operands = 0 : i64, tpu.core_type = #tpu.core_type<tc>, window_params = [{transform_indices = @transform_0, window_bounds = array<i64: 1, 8, 128>}, {transform_indices = @transform_1, window_bounds = array<i64: 1, 8, 128>}, {transform_indices = @transform_2, window_bounds = array<i64: 1, 8, 128>}, {transform_indices = @transform_3, window_bounds = array<i64: 1, 8, 128>}]} {
    %c0_i32 = arith.constant 0 : i32
    %0 = arith.cmpi eq, %arg1, %c0_i32 : i32
    %1 = arith.extui %0 : i1 to i32
    %c0_i32_0 = arith.constant 0 : i32
    %2 = arith.cmpi ne, %1, %c0_i32_0 : i32
    scf.if %2 {
      %cst_25 = arith.constant 0.000000e+00 : f32
      %47 = vector.broadcast %cst_25 : f32 to vector<1x8x128xf32>
      %c0_26 = arith.constant 0 : index
      %c0_27 = arith.constant 0 : index
      %c0_28 = arith.constant 0 : index
      %48 = vector.load %arg4[%c0_26, %c0_27, %c0_28] : memref<1x8x128xf32, #tpu.memory_space<vmem>>, vector<1x8x128xf32>
      tpu.vector_store %arg4[%c0_26, %c0_27, %c0_28], %47 {strides = array<i32>} : memref<1x8x128xf32, #tpu.memory_space<vmem>>, vector<1x8x128xf32>,
      %cst_29 = arith.constant 0.000000e+00 : f32
      %49 = vector.broadcast %cst_29 : f32 to vector<1x8x128xf32>
      %c0_30 = arith.constant 0 : index
      %c0_31 = arith.constant 0 : index
      %c0_32 = arith.constant 0 : index
      %50 = vector.load %arg5[%c0_30, %c0_31, %c0_32] : memref<1x8x128xf32, #tpu.memory_space<vmem>>, vector<1x8x128xf32>
      tpu.vector_store %arg5[%c0_30, %c0_31, %c0_32], %49 {strides = array<i32>} : memref<1x8x128xf32, #tpu.memory_space<vmem>>, vector<1x8x128xf32>,
    } else {
    }
    %c0 = arith.constant 0 : index
    %c0_1 = arith.constant 0 : index
    %c0_2 = arith.constant 0 : index
    %3 = vector.load %arg2[%c0, %c0_1, %c0_2] : memref<1x8x128xf32, #tpu.memory_space<vmem>>, vector<1x8x128xf32>
    %4 = vector.shape_cast %3 : vector<1x8x128xf32> to vector<8x128xf32>
    %c0_3 = arith.constant 0 : index
    %c0_4 = arith.constant 0 : index
    %c0_5 = arith.constant 0 : index
    %5 = vector.load %arg3[%c0_3, %c0_4, %c0_5] : memref<1x8x128xf32, #tpu.memory_space<vmem>>, vector<1x8x128xf32>
    %6 = vector.shape_cast %5 : vector<1x8x128xf32> to vector<8x128xf32>
    %cst = arith.constant 1.000000e+00 : f32
    %7 = vector.broadcast %cst : f32 to vector<8x128xf32>
    %8 = arith.subf %7, %4 : vector<8x128xf32>
    %cst_6 = arith.constant 9.99999997E-7 : f32
    %9 = vector.broadcast %cst_6 : f32 to vector<8x128xf32>
    %10 = arith.addf %4, %9 : vector<8x128xf32>
    %11 = math.log %10 : vector<8x128xf32>
    %12 = arith.mulf %6, %11 : vector<8x128xf32>
    %13 = arith.mulf %8, %8 : vector<8x128xf32>
    %14 = arith.mulf %12, %13 : vector<8x128xf32>
    %cst_7 = arith.constant 1.000000e+00 : f32
    %15 = vector.broadcast %cst_7 : f32 to vector<8x128xf32>
    %16 = arith.subf %15, %6 : vector<8x128xf32>
    %cst_8 = arith.constant 9.99999997E-7 : f32
    %17 = vector.broadcast %cst_8 : f32 to vector<8x128xf32>
    %18 = arith.addf %8, %17 : vector<8x128xf32>
    %19 = math.log %18 : vector<8x128xf32>
    %20 = arith.mulf %16, %19 : vector<8x128xf32>
    %21 = arith.mulf %4, %4 : vector<8x128xf32>
    %22 = arith.mulf %20, %21 : vector<8x128xf32>
    %23 = tpu.iota {dimensions = array<i32: 0>} : vector<8x128xi32>
    %24 = tpu.iota {dimensions = array<i32: 1>} : vector<8x128xi32>
    %c1024_i32 = arith.constant 1024 : i32
    %25 = arith.muli %arg1, %c1024_i32 : i32
    %c128_i32 = arith.constant 128 : i32
    %26 = vector.broadcast %c128_i32 : i32 to vector<8x128xi32>
    %27 = arith.muli %23, %26 : vector<8x128xi32>
    %28 = vector.broadcast %25 : i32 to vector<8x128xi32>
    %29 = arith.addi %28, %27 : vector<8x128xi32>
    %30 = arith.addi %29, %24 : vector<8x128xi32>
    %c256_i32 = arith.constant 256 : i32
    %31 = vector.broadcast %c256_i32 : i32 to vector<8x128xi32>
    %32 = arith.cmpi slt, %30, %31 : vector<8x128xi32>
    %cst_9 = arith.constant 0.000000e+00 : f32
    %33 = vector.broadcast %cst_9 : f32 to vector<8x128xf32>
    %34 = arith.select %32, %14, %33 : vector<8x128xi1>, vector<8x128xf32>
    %cst_10 = arith.constant 0.000000e+00 : f32
    %35 = vector.broadcast %cst_10 : f32 to vector<8x128xf32>
    %36 = arith.select %32, %22, %35 : vector<8x128xi1>, vector<8x128xf32>
    %c0_11 = arith.constant 0 : index
    %c0_12 = arith.constant 0 : index
    %c0_13 = arith.constant 0 : index
    %37 = vector.load %arg4[%c0_11, %c0_12, %c0_13] : memref<1x8x128xf32, #tpu.memory_space<vmem>>, vector<1x8x128xf32>
    %38 = vector.shape_cast %34 : vector<8x128xf32> to vector<1x1x8x128xf32>
    %cst_14 = arith.constant dense<0.000000e+00> : vector<1x8x128xf32>
    %39 = vector.multi_reduction <add>, %38, %cst_14 [1] : vector<1x1x8x128xf32> to vector<1x8x128xf32>
    %40 = arith.addf %37, %39 : vector<1x8x128xf32>
    %c0_15 = arith.constant 0 : index
    %c0_16 = arith.constant 0 : index
    %c0_17 = arith.constant 0 : index
    %41 = vector.load %arg4[%c0_15, %c0_16, %c0_17] : memref<1x8x128xf32, #tpu.memory_space<vmem>>, vector<1x8x128xf32>
    tpu.vector_store %arg4[%c0_15, %c0_16, %c0_17], %40 {strides = array<i32>} : memref<1x8x128xf32, #tpu.memory_space<vmem>>, vector<1x8x128xf32>,
    %c0_18 = arith.constant 0 : index
    %c0_19 = arith.constant 0 : index
    %c0_20 = arith.constant 0 : index
    %42 = vector.load %arg5[%c0_18, %c0_19, %c0_20] : memref<1x8x128xf32, #tpu.memory_space<vmem>>, vector<1x8x128xf32>
    %43 = vector.shape_cast %36 : vector<8x128xf32> to vector<1x1x8x128xf32>
    %cst_21 = arith.constant dense<0.000000e+00> : vector<1x8x128xf32>
    %44 = vector.multi_reduction <add>, %43, %cst_21 [1] : vector<1x1x8x128xf32> to vector<1x8x128xf32>
    %45 = arith.addf %42, %44 : vector<1x8x128xf32>
    %c0_22 = arith.constant 0 : index
    %c0_23 = arith.constant 0 : index
    %c0_24 = arith.constant 0 : index
    %46 = vector.load %arg5[%c0_22, %c0_23, %c0_24] : memref<1x8x128xf32, #tpu.memory_space<vmem>>, vector<1x8x128xf32>
    tpu.vector_store %arg5[%c0_22, %c0_23, %c0_24], %45 {strides = array<i32>} : memref<1x8x128xf32, #tpu.memory_space<vmem>>, vector<1x8x128xf32>,
    return
  }
  func.func @transform_0(%arg0: i32, %arg1: i32) -> (i32, i32, i32) {
    %c0_i32 = arith.constant 0 : i32
    %c0_i32_0 = arith.constant 0 : i32
    return %arg0, %arg1, %c0_i32 : i32, i32, i32
  }
  func.func @transform_1(%arg0: i32, %arg1: i32) -> (i32, i32, i32) {
    %c0_i32 = arith.constant 0 : i32
    %c0_i32_0 = arith.constant 0 : i32
    return %arg0, %arg1, %c0_i32 : i32, i32, i32
  }
  func.func @transform_2(%arg0: i32, %arg1: i32) -> (i32, i32, i32) {
    %c0_i32 = arith.constant 0 : i32
    %c0_i32_0 = arith.constant 0 : i32
    %c0_i32_1 = arith.constant 0 : i32
    return %arg0, %c0_i32, %c0_i32_0 : i32, i32, i32
  }
  func.func @transform_3(%arg0: i32, %arg1: i32) -> (i32, i32, i32) {
    %c0_i32 = arith.constant 0 : i32
    %c0_i32_0 = arith.constant 0 : i32
    %c0_i32_1 = arith.constant 0 : i32
    return %arg0, %c0_i32, %c0_i32_0 : i32, i32, i32
  }
}

</mosaic_0001>

<llo_original>
// kernel: tpu_custom_call.1
$region0: #{tpu_custom_call.1}
  #allocation0 [shape = 'u32[]', space=smem, size = 0x4, offset = 0x4, fixed_abs, tag = 'smem constant byte address 0x4 - core index']
  #allocation1 [shape = 'u32[144,128]{1,0:T(1,128)}', space=vmem, size = 0x12000, scoped, tag = 'internal scratch']
  %s0 = inlined_call_operand.hbm [shape: f32[2,2,128], index: 0, kind: input, shape index: {}]
  %s1 = inlined_call_operand.hbm [shape: f32[2,2,128], index: 1, kind: input, shape index: {}]
  %s2 = inlined_call_operand.hbm [shape: f32[2,8,128], index: 2, kind: output, shape index: {0}]
  %s3 = inlined_call_operand.hbm [shape: f32[2,8,128], index: 3, kind: output, shape index: {1}]
  %4 = xla_tuple %s2, %s3
  %s5 = sld [smem:[#allocation0]]
  $region61: #{tpu_custom_call.1} parent=0
    _
  %s7 = ssub.s32 1, %s5
  %s8 = scalar_select 0, %s7, %s5
  $region1: #{tpu_custom_call.1} parent=0
    #allocation2 [shape = 'u8[8192]{0}', space=vmem, size = 0x2000, scoped, tag = 'input window, operand 0']
    #allocation3 [shape = 's32[2]{0}', space=sflag, size = 0x8, scoped, tag = 'scoped memory for tpu_custom_call.1']
    #allocation4 [shape = 's32[2]{0}', space=sflag, size = 0x8, scoped, tag = 'scoped memory for tpu_custom_call.1']
    #allocation5 [shape = 'u8[8192]{0}', space=vmem, size = 0x2000, scoped, tag = 'input window, operand 1']
    #allocation6 [shape = 's32[2]{0}', space=sflag, size = 0x8, scoped, tag = 'scoped memory for tpu_custom_call.1']
    #allocation7 [shape = 'u8[8192]{0}', space=vmem, size = 0x2000, scoped, tag = 'output window, operand 0']
    #allocation8 [shape = 'u8[8192]{0}', space=vmem, size = 0x2000, scoped, tag = 'output window, operand 1']
    #allocation9 [shape = 's32[2]{0}', space=sflag, size = 0x8, scoped, tag = 'scoped memory for tpu_custom_call.1']
    %9 = vsyncpa [#allocation3], 0
    %s10 = scalar_lea.sflag [#allocation3], 1
    %11 = vsyncpa %s10, 0
    %12 = vsyncpa [#allocation6], 0
    %s13 = scalar_lea.sflag [#allocation6], 1
    %14 = vsyncpa %s13, 0
    %15 = vsyncpa [#allocation4], 0
    %s16 = scalar_lea.sflag [#allocation4], 1
    %17 = vsyncpa %s16, 0
    %18 = vsyncpa [#allocation9], 0
    %s19 = scalar_lea.sflag [#allocation9], 1
    %20 = vsyncpa %s19, 0
    loop: start=0, step=1, limit=4
    $region2: #{tpu_custom_call.1} parent=1 // loop_pre_header
      _
    $region3: #{tpu_custom_call.1} parent=1 // loop_header
      %s22 = sphi 0, %s26
      %p23 = scmp.ge.s32.totalorder %s22, 4
      %s29 = sphi 0, %s41
      %s30 = sphi 0, %s37
      %s31 = sphi 0, %s29
      %s32 = sphi 0, %s30
      %s33 = sphi 0, %s31
      %s34 = sphi 0, %s32
      %s46 = sphi 0, %s48
      %s49 = sphi 0, %s46
      %s50 = sphi 0, %s49
      %s66 = sphi 0, %s50
      %s74 = sphi 0, %s76
      %s77 = sphi 0, %s74
      %s78 = sphi 0, %s77
      %s94 = sphi 0, %s78
      %s100 = sphi 0, %s102
      %s103 = sphi 0, %s100
      %s104 = sphi 0, %s103
      %s120 = sphi 0, %s104
      %s126 = sphi 0, %s128
      %s129 = sphi 0, %s126
      %s130 = sphi 0, %s129
      %s146 = sphi 0, %s130
    $region4: #{tpu_custom_call.1} parent=1 // loop_header_branch
      %25 = sbr.rel (%p23) target = $region8
    $region5: #{tpu_custom_call.1} parent=1 // loop_body
      %s27 = ssub.s32 %s22, 1
      %s28 = ssub.s32 %s22, 2
      %s35 = sadd.s32 1, %s30
      %p36 = scmp.ge.s32.totalorder %s35, 1
      %s37 = scalar_select %p36, 0, %s35
      %s38 = sadd.s32 1, %s29
      %s39 = scalar_select %p36, %s38, %s29
      %p40 = scmp.ge.s32.totalorder %s39, 2
      %s41 = scalar_select %p40, 0, %s39
      %s42 = ssub.s32 %s29, %s41
      %s43 = ssub.s32 %s30, %s37
      %s44 = sor.u32 %s42, %s43
      %p45 = scmp.eq.s32.totalorder %s44, 0
      %s47 = sadd.s32 %s46, 1
      %s48 = scalar_select %p45, %s46, %s47
      %p51 = pneg %p45
      %p52 = scmp.eq.s32.totalorder %s22, 1
      %p53 = por %p51, %p52
      %p54 = scmp.ne.s32.totalorder %s46, %s49
      %p55 = scmp.eq.s32.totalorder %s22, 0
      %p56 = por %p54, %p55
      %p57 = scmp.ne.s32.totalorder %s46, %s49
      %p58 = scmp.eq.s32.totalorder %s27, 1
      %p59 = por %p57, %p58
      %p60 = scmp.ne.s32.totalorder %s49, %s50
      %p61 = scmp.eq.s32.totalorder %s27, 0
      %p62 = por %p60, %p61
      %p63 = scmp.ne.s32.totalorder %s49, %s50
      %p64 = scmp.eq.s32.totalorder %s28, 1
      %p65 = por %p63, %p64
      %p67 = scmp.ne.s32.totalorder %s50, %s66
      %p68 = scmp.eq.s32.totalorder %s28, 0
      %p69 = por %p67, %p68
      %s70 = ssub.s32 %s29, %s41
      %s71 = ssub.s32 %s30, %s37
      %s72 = sor.u32 %s70, %s71
      %p73 = scmp.eq.s32.totalorder %s72, 0
      %s75 = sadd.s32 %s74, 1
      %s76 = scalar_select %p73, %s74, %s75
      %p79 = pneg %p73
      %p80 = scmp.eq.s32.totalorder %s22, 1
      %p81 = por %p79, %p80
      %p82 = scmp.ne.s32.totalorder %s74, %s77
      %p83 = scmp.eq.s32.totalorder %s22, 0
      %p84 = por %p82, %p83
      %p85 = scmp.ne.s32.totalorder %s74, %s77
      %p86 = scmp.eq.s32.totalorder %s27, 1
      %p87 = por %p85, %p86
      %p88 = scmp.ne.s32.totalorder %s77, %s78
      %p89 = scmp.eq.s32.totalorder %s27, 0
      %p90 = por %p88, %p89
      %p91 = scmp.ne.s32.totalorder %s77, %s78
      %p92 = scmp.eq.s32.totalorder %s28, 1
      %p93 = por %p91, %p92
      %p95 = scmp.ne.s32.totalorder %s78, %s94
      %p96 = scmp.eq.s32.totalorder %s28, 0
      %p97 = por %p95, %p96
      %s98 = ssub.s32 %s29, %s41
      %p99 = scmp.eq.s32.totalorder %s98, 0
      %s101 = sadd.s32 %s100, 1
      %s102 = scalar_select %p99, %s100, %s101
      %p105 = pneg %p99
      %p106 = scmp.eq.s32.totalorder %s22, 1
      %p107 = por %p105, %p106
      %p108 = scmp.ne.s32.totalorder %s100, %s103
      %p109 = scmp.eq.s32.totalorder %s22, 0
      %p110 = por %p108, %p109
      %p111 = scmp.ne.s32.totalorder %s100, %s103
      %p112 = scmp.eq.s32.totalorder %s27, 1
      %p113 = por %p111, %p112
      %p114 = scmp.ne.s32.totalorder %s103, %s104
      %p115 = scmp.eq.s32.totalorder %s27, 0
      %p116 = por %p114, %p115
      %p117 = scmp.ne.s32.totalorder %s103, %s104
      %p118 = scmp.eq.s32.totalorder %s28, 1
      %p119 = por %p117, %p118
      %p121 = scmp.ne.s32.totalorder %s104, %s120
      %p122 = scmp.eq.s32.totalorder %s28, 0
      %p123 = por %p121, %p122
      %s124 = ssub.s32 %s29, %s41
      %p125 = scmp.eq.s32.totalorder %s124, 0
      %s127 = sadd.s32 %s126, 1
      %s128 = scalar_select %p125, %s126, %s127
      %p131 = pneg %p125
      %p132 = scmp.eq.s32.totalorder %s22, 1
      %p133 = por %p131, %p132
      %p134 = scmp.ne.s32.totalorder %s126, %s129
      %p135 = scmp.eq.s32.totalorder %s22, 0
      %p136 = por %p134, %p135
      %p137 = scmp.ne.s32.totalorder %s126, %s129
      %p138 = scmp.eq.s32.totalorder %s27, 1
      %p139 = por %p137, %p138
      %p140 = scmp.ne.s32.totalorder %s129, %s130
      %p141 = scmp.eq.s32.totalorder %s27, 0
      %p142 = por %p140, %p141
      %p143 = scmp.ne.s32.totalorder %s129, %s130
      %p144 = scmp.eq.s32.totalorder %s28, 1
      %p145 = por %p143, %p144
      %p147 = scmp.ne.s32.totalorder %s130, %s146
      %p148 = scmp.eq.s32.totalorder %s28, 0
      %p149 = por %p147, %p148
      %p150 = scmp.le.s32.totalorder 1, %s22
      %p151 = scmp.lt.s32.totalorder %s22, 3
      %p152 = pnand %p150, %p151
      %p153 = pneg %p152
      // Predicated region
      $region9: #{tpu_custom_call.1} parent=5 // pred_check
        _
      $region10: #{tpu_custom_call.1} parent=5 // pred_check_branch
        %155 = sbr.rel (%p152) target = $region12
      $region11: #{tpu_custom_call.1} parent=5 // pred_region
        %s156 = ssub.s32 %s22, 1
      $region12: #{tpu_custom_call.1} parent=5 // pred_fallthru
        _
      %p157 = scmp.lt.s32.totalorder %s22, 2
      // Predicated region
      $region13: #{tpu_custom_call.1} parent=5 // pred_check
        %p158 = pneg %p157
      $region14: #{tpu_custom_call.1} parent=5 // pred_check_branch
        %160 = sbr.rel (%p158) target = $region16
      $region15: #{tpu_custom_call.1} parent=5 // pred_region
        // Predicated region
        $region17: #{tpu_custom_call.1} parent=15 // pred_check
          %p161 = pneg %p56
        $region18: #{tpu_custom_call.1} parent=15 // pred_check_branch
          %163 = sbr.rel (%p161) target = $region20
        $region19: #{tpu_custom_call.1} parent=15 // pred_region
          %s164 = sand.u32 %s46, 1
          %s165 = scalar_lea.sflag [#allocation3], %s164
          %s166 = sand.u32 %s46, 1
          %s167 = smul.addr %s166, 8
          %s168 = scalar_lea.vmem [#allocation2], %s167
          %s169 = smul.u32 4, %s30
          %s170 = ssub.s32 1, %s169
          %s171 = smul.u32 32, %s170
          %s173 = ssub.s32 128, %s171
          %174 = vsyncadd %s165, %s173
          %p175 = scmp.ne.s32.totalorder 0, %s171
          %s176 = sadd.s32 %s169, %s29
          %s177 = smul.addr %s176, 32
          %s178 = scalar_lea.hbm %s0, %s177
          %s179 = smul.u32 2, %s170
          %s180 = sshll.u32 %s168, 4
          %s181 = int_to_ptr.vmem [resolvable:$true] %s180
          %s182 = sshll.u32 %s179, 4
          %186 = dma.hbm_to_vmem [thread:$0]  (%p175), %s178, %s182, %s181, %s165, 32, 32, 2
        $region20: #{tpu_custom_call.1} parent=15 // pred_fallthru
          _
        // Predicated region
        $region21: #{tpu_custom_call.1} parent=15 // pred_check
          %p187 = pneg %p84
        $region22: #{tpu_custom_call.1} parent=15 // pred_check_branch
          %189 = sbr.rel (%p187) target = $region24
        $region23: #{tpu_custom_call.1} parent=15 // pred_region
          %s190 = sand.u32 %s74, 1
          %s191 = scalar_lea.sflag [#allocation6], %s190
          %s192 = sand.u32 %s74, 1
          %s193 = smul.addr %s192, 8
          %s194 = scalar_lea.vmem [#allocation5], %s193
          %s195 = smul.u32 4, %s30
          %s196 = ssub.s32 1, %s195
          %s197 = smul.u32 32, %s196
          %s199 = ssub.s32 128, %s197
          %200 = vsyncadd %s191, %s199
          %p201 = scmp.ne.s32.totalorder 0, %s197
          %s202 = sadd.s32 %s195, %s29
          %s203 = smul.addr %s202, 32
          %s204 = scalar_lea.hbm %s1, %s203
          %s205 = smul.u32 2, %s196
          %s206 = sshll.u32 %s194, 4
          %s207 = int_to_ptr.vmem [resolvable:$true] %s206
          %s208 = sshll.u32 %s205, 4
          %212 = dma.hbm_to_vmem [thread:$0]  (%p201), %s204, %s208, %s207, %s191, 32, 32, 2
        $region24: #{tpu_custom_call.1} parent=15 // pred_fallthru
          _
      $region16: #{tpu_custom_call.1} parent=5 // pred_fallthru
        _
      %p213 = scmp.le.s32.totalorder 1, %s22
      %p214 = scmp.lt.s32.totalorder %s22, 3
      %p215 = pnand %p213, %p214
      %p216 = pneg %p215
      // Predicated region
      $region25: #{tpu_custom_call.1} parent=5 // pred_check
        _
      $region26: #{tpu_custom_call.1} parent=5 // pred_check_branch
        %218 = sbr.rel (%p215) target = $region28
      $region27: #{tpu_custom_call.1} parent=5 // pred_region
        %s219 = ssub.s32 %s22, 1
        %s220 = sand.u32 %s49, 1
        %s221 = scalar_lea.sflag [#allocation3], %s220
        %s222 = sand.u32 %s49, 1
        %s223 = smul.addr %s222, 8
        %s224 = scalar_lea.vmem [#allocation2], %s223
        // Predicated region
        $region29: #{tpu_custom_call.1} parent=27 // pred_check
          %p225 = pneg %p62
        $region30: #{tpu_custom_call.1} parent=27 // pred_check_branch
          %227 = sbr.rel (%p225) target = $region32
        $region31: #{tpu_custom_call.1} parent=27 // pred_region
          %228 = dma.done %s221, 128
        $region32: #{tpu_custom_call.1} parent=27 // pred_fallthru
          _
        %s229 = sand.u32 %s77, 1
        %s230 = scalar_lea.sflag [#allocation6], %s229
        %s231 = sand.u32 %s77, 1
        %s232 = smul.addr %s231, 8
        %s233 = scalar_lea.vmem [#allocation5], %s232
        // Predicated region
        $region33: #{tpu_custom_call.1} parent=27 // pred_check
          %p234 = pneg %p90
        $region34: #{tpu_custom_call.1} parent=27 // pred_check_branch
          %236 = sbr.rel (%p234) target = $region36
        $region35: #{tpu_custom_call.1} parent=27 // pred_region
          %237 = dma.done %s230, 128
        $region36: #{tpu_custom_call.1} parent=27 // pred_fallthru
          _
        %s238 = sand.u32 %s49, 1
        %s239 = scalar_lea.sflag [#allocation3], %s238
        %s240 = sand.u32 %s49, 1
        %s241 = smul.addr %s240, 8
        %s242 = scalar_lea.vmem [#allocation2], %s241
        %p243 = pneg %p62
        %p244 = pneg %p59
        %s245 = sand.u32 %s77, 1
        %s246 = scalar_lea.sflag [#allocation6], %s245
        %s247 = sand.u32 %s77, 1
        %s248 = smul.addr %s247, 8
        %s249 = scalar_lea.vmem [#allocation5], %s248
        %p250 = pneg %p90
        %p251 = pneg %p87
        %p252 = pneg %p116
        %p253 = pneg %p113
        %s254 = sand.u32 %s103, 1
        %s255 = scalar_lea.sflag [#allocation4], %s254
        %s256 = sand.u32 %s103, 1
        %s257 = smul.addr %s256, 8
        %s258 = scalar_lea.vmem [#allocation7], %s257
        %p259 = pneg %p142
        %p260 = pneg %p139
        %s261 = sand.u32 %s129, 1
        %s262 = scalar_lea.sflag [#allocation9], %s261
        %s263 = sand.u32 %s129, 1
        %s264 = smul.addr %s263, 8
        %s265 = scalar_lea.vmem [#allocation8], %s264
        %s266 = smul.u32 4, %s32
        %s267 = ssub.s32 1, %s266
        %s268 = smul.u32 32, %s267
        %s269 = smul.u32 4, %s32
        %s270 = ssub.s32 1, %s269
        %s271 = smul.u32 32, %s270
        %p272 = scmp.eq.s32.totalorder %s32, 0
        // Predicated region
        $region37: #{tpu_custom_call.1} parent=27 // pred_check
          %p273 = pneg %p272
        $region38: #{tpu_custom_call.1} parent=27 // pred_check_branch
          %275 = sbr.rel (%p273) target = $region40
        $region39: #{tpu_custom_call.1} parent=27 // pred_region
          %276 = vst [vmem:[%s258] sm:$0xff] 0.0
          %277 = vst [vmem:[%s265] sm:$0xff] 0.0
        $region40: #{tpu_custom_call.1} parent=27 // pred_fallthru
          _
        %v278 = vld [vmem:[%s224] sm:$0xff]
        %v279 = vld [vmem:[%s233] sm:$0xff]
        %v280 = vsub.f32 1.0, %v278
        %v281 = vadd.f32 %v278, 1e-06
        %v282 = vlog2.pop %v281
        %v283 = vmul.f32 %v282, 0.6931472
        %v284 = vmul.f32 %v279, %v283
        %v285 = vmul.f32 %v280, %v280
        %v286 = vmul.f32 %v284, %v285
        %v287 = vsub.f32 1.0, %v279
        %v288 = vadd.f32 %v280, 1e-06
        %v289 = vlog2.pop %v288
        %v290 = vmul.f32 %v289, 0.6931472
        %v291 = vmul.f32 %v287, %v290
        %v292 = vmul.f32 %v278, %v278
        %v293 = vmul.f32 %v291, %v292
        %v294 = vlaneseq
        %v295 = vshrl.u32 %v294, 7
        %v296 = vlaneseq
        %v297 = vand.u32 %v296, 127
        %s298 = smul.u32 %s32, 1024
        %v299 = vmul.u32 %v295, 128
        %v300 = vstv %s298
        %v301 = vadd.s32 %v300, %v299
        %v302 = vadd.s32 %v301, %v297
        %vm303 = vcmp.lt.s32.totalorder %v302, 256
        %v304 = vsel %vm303, %v286, 0.0
        %v305 = vsel %vm303, %v293, 0.0
        %v306 = vld [vmem:[%s258] sm:$0xff]
        %v307 = vadd.f32 %v304, 0.0
        %v308 = vadd.f32 %v306, %v307
        %309 = vst [vmem:[%s258] sm:$0xff] %v308
        %v310 = vld [vmem:[%s265] sm:$0xff]
        %v311 = vadd.f32 %v305, 0.0
        %v312 = vadd.f32 %v310, %v311
        %313 = vst [vmem:[%s265] sm:$0xff] %v312
        %s314 = sand.u32 %s103, 1
        %s315 = scalar_lea.sflag [#allocation4], %s314
        %s316 = sand.u32 %s103, 1
        %s317 = smul.addr %s316, 8
        %s318 = scalar_lea.vmem [#allocation7], %s317
        %s319 = sand.u32 %s129, 1
        %s320 = scalar_lea.sflag [#allocation9], %s319
        %s321 = sand.u32 %s129, 1
        %s322 = smul.addr %s321, 8
        %s323 = scalar_lea.vmem [#allocation8], %s322
        // Predicated region
        $region41: #{tpu_custom_call.1} parent=27 // pred_check
          %p324 = pneg %p113
        $region42: #{tpu_custom_call.1} parent=27 // pred_check_branch
          %326 = sbr.rel (%p324) target = $region44
        $region43: #{tpu_custom_call.1} parent=27 // pred_region
          %s328 = ssub.s32 128, 128
          %329 = vsyncadd %s315, %s328
          %s330 = smul.addr %s31, 128
          %s331 = scalar_lea.hbm %s2, %s330
          %s333 = sshll.u32 %s318, 4
          %s334 = int_to_ptr.vmem [resolvable:$true] %s333
          %336 = dma.vmem_to_hbm [thread:$0]  %s334, 128, %s331, %s315
        $region44: #{tpu_custom_call.1} parent=27 // pred_fallthru
          _
        // Predicated region
        $region45: #{tpu_custom_call.1} parent=27 // pred_check
          %p337 = pneg %p139
        $region46: #{tpu_custom_call.1} parent=27 // pred_check_branch
          %339 = sbr.rel (%p337) target = $region48
        $region47: #{tpu_custom_call.1} parent=27 // pred_region
          %s341 = ssub.s32 128, 128
          %342 = vsyncadd %s320, %s341
          %s343 = smul.addr %s31, 128
          %s344 = scalar_lea.hbm %s3, %s343
          %s346 = sshll.u32 %s323, 4
          %s347 = int_to_ptr.vmem [resolvable:$true] %s346
          %349 = dma.vmem_to_hbm [thread:$0]  %s347, 128, %s344, %s320
        $region48: #{tpu_custom_call.1} parent=27 // pred_fallthru
          _
      $region28: #{tpu_custom_call.1} parent=5 // pred_fallthru
        _
      %p350 = scmp.le.s32.totalorder 2, %s22
      // Predicated region
      $region49: #{tpu_custom_call.1} parent=5 // pred_check
        %p351 = pneg %p350
      $region50: #{tpu_custom_call.1} parent=5 // pred_check_branch
        %353 = sbr.rel (%p351) target = $region52
      $region51: #{tpu_custom_call.1} parent=5 // pred_region
        %s354 = ssub.s32 %s22, 2
        // Predicated region
        $region53: #{tpu_custom_call.1} parent=51 // pred_check
          %p355 = pneg %p119
        $region54: #{tpu_custom_call.1} parent=51 // pred_check_branch
          %357 = sbr.rel (%p355) target = $region56
        $region55: #{tpu_custom_call.1} parent=51 // pred_region
          %s358 = sand.u32 %s104, 1
          %s359 = scalar_lea.sflag [#allocation4], %s358
          %s360 = sand.u32 %s104, 1
          %s361 = smul.addr %s360, 8
          %s362 = scalar_lea.vmem [#allocation7], %s361
          %363 = dma.done %s359, 128
        $region56: #{tpu_custom_call.1} parent=51 // pred_fallthru
          _
        // Predicated region
        $region57: #{tpu_custom_call.1} parent=51 // pred_check
          %p364 = pneg %p145
        $region58: #{tpu_custom_call.1} parent=51 // pred_check_branch
          %366 = sbr.rel (%p364) target = $region60
        $region59: #{tpu_custom_call.1} parent=51 // pred_region
          %s367 = sand.u32 %s130, 1
          %s368 = scalar_lea.sflag [#allocation9], %s367
          %s369 = sand.u32 %s130, 1
          %s370 = smul.addr %s369, 8
          %s371 = scalar_lea.vmem [#allocation8], %s370
          %372 = dma.done %s368, 128
        $region60: #{tpu_custom_call.1} parent=51 // pred_fallthru
          _
      $region52: #{tpu_custom_call.1} parent=5 // pred_fallthru
        _
    $region6: #{tpu_custom_call.1} parent=1 // loop_footer
      %s26 = sadd.s32 1, %s22
    $region7: #{tpu_custom_call.1} parent=1 // loop_footer_branch
      %21 = sbr.rel target = $region3
    $region8: #{tpu_custom_call.1} parent=1 // loop_exit
      _
    %373 = vsyncpa [#allocation3], 1
    %s374 = scalar_lea.sflag [#allocation3], 1
    %375 = vsyncpa %s374, 1
    %376 = vsyncpa [#allocation6], 1
    %s377 = scalar_lea.sflag [#allocation6], 1
    %378 = vsyncpa %s377, 1
    %379 = vsyncpa [#allocation4], 1
    %s380 = scalar_lea.sflag [#allocation4], 1
    %381 = vsyncpa %s380, 1
    %382 = vsyncpa [#allocation9], 1
    %s383 = scalar_lea.sflag [#allocation9], 1
    %384 = vsyncpa %s383, 1

</llo_original>
